<compile_context>
chip_gen: v6e
topology: v6e:2x2x1
jax: 0.10.0
libtpu: 0.0.40
codegen_flags: <defaults>
</compile_context>

<pallas_src>
import functools

import jax
import jax.numpy as jnp
from jax.experimental import pallas as pl
from jax.experimental.pallas import tpu as pltpu

LN_EPS = 1e-5


def _round_up(x, m):
    return ((x + m - 1) // m) * m


def fused_embedding_kernel(aggw_ref, ids_ref, feat_ref, gtab_ref, w_ref,
                           b_ref, gamma_ref, beta_ref, out_ref,
                           *, gather_in_kernel):
    """One tile of TM token rows.

    aggw_ref  : (G,)       SMEM f32   softmax-ed genre aggregation weights
    ids_ref   : (TM, 1+G)  VMEM int32 [token_id, genre_id_0..genre_id_{G-1}]
    feat_ref  : gather_in_kernel -> (VP, E) VMEM bf16 token table (row-padded)
                else            -> (TM, E) VMEM bf16 pre-gathered token emb
    gtab_ref  : (NGP, E)   VMEM bf16  genre table (rows zero-padded)
    w_ref     : (2E, E)    VMEM bf16  fusion W^T
    b/gamma/beta : (1, E)  VMEM f32
    out_ref   : (TM, E)    VMEM out dtype
    """
    tm = out_ref.shape[0]
    ngp = gtab_ref.shape[0]
    ids = ids_ref[...]                                        # (TM, 1+G) int32
    g_slots = ids.shape[1] - 1
    cdt = w_ref.dtype

    # ---- token embedding ----
    if gather_in_kernel:
        vp = feat_ref.shape[0]
        col_v = jax.lax.broadcasted_iota(jnp.int32, (tm, vp), 1)
        sel_tok = (col_v == ids[:, 0:1]).astype(cdt)          # bf16 one-hot
        tok = jnp.dot(sel_tok, feat_ref[...],
                      preferred_element_type=jnp.float32).astype(cdt)
    else:
        tok = feat_ref[...]                                   # (TM, E) bf16

    # ---- genre aggregation: weighted one-hot selector + MXU matmul ----
    # Duplicated genre ids (e.g. padding 0) accumulate their weights, matching
    # einsum('bsgd,g->bsd') over the gathered embeddings exactly.
    col_g = jax.lax.broadcasted_iota(jnp.int32, (tm, ngp), 1)
    sel = jnp.zeros((tm, ngp), jnp.float32)
    for g in range(g_slots):                                  # G small & static
        sel = sel + jnp.where(col_g == ids[:, g + 1:g + 2], aggw_ref[g], 0.0)
    agg = jnp.dot(sel.astype(cdt), gtab_ref[...],
                  preferred_element_type=jnp.float32)         # (TM, E) f32

    # ---- fusion Linear(2E -> E): single K=2E MXU pass ----
    cat = jnp.concatenate([tok, agg.astype(cdt)], axis=-1)    # (TM, 2E) bf16
    h = jnp.dot(cat, w_ref[...],
                preferred_element_type=jnp.float32) + b_ref[...]

    # ---- LayerNorm (torch defaults, f32) + ReLU ----
    mean = jnp.mean(h, axis=-1, keepdims=True)
    var = jnp.mean(jnp.square(h - mean), axis=-1, keepdims=True)
    hn = (h - mean) * jax.lax.rsqrt(var + LN_EPS)
    hn = hn * gamma_ref[...] + beta_ref[...]

    out_ref[...] = jnp.maximum(hn, 0.0).astype(out_ref.dtype)


def _choose_tm(n_rows, e, g, vp, ngp, out_itemsize, gather_in_kernel,
               requested):
    """Row tile: large, multiple of 8, >=2 grid steps, VMEM-budget aware."""
    tm = min(requested, _round_up(n_rows, 8))
    tm = max(8, (tm // 8) * 8)
    # Keep >= 2 grid steps so both v7x TensorCores get work when possible.
    if n_rows > 8:
        tm = min(tm, max(8, _round_up((n_rows + 1) // 2, 8)))

    # Constant-index blocks (default double-buffered).
    const_bytes = (ngp * e * 2 + 2 * e * e * 2 + 3 * 8 * e * 4)
    if gather_in_kernel:
        const_bytes += vp * e * 2
    const_bytes *= 2

    def tile_bytes(t):
        # Double-buffered streams: ids (lane-padded int32 tile) + output.
        stream = 2 * (t * 128 * 4 + t * e * out_itemsize)
        if not gather_in_kernel:
            stream += 2 * t * e * 2                      # pre-gathered tokens
        # In-kernel intermediates: genre selector (f32), tok/agg/h/hn (f32),
        # concatenated bf16 operand, optional token one-hot (bf16).
        inter = t * (ngp * 4 + 4 * e * 4 + 2 * e * 2)
        if gather_in_kernel:
            inter += t * vp * 2
        return stream + inter

    budget = 20 * 1024 * 1024        # conservative: fits v5e/v6e/v7x scoped VMEM
    while tm > 8 and const_bytes + tile_bytes(tm) > budget:
        tm = max(8, ((tm // 2) // 8) * 8)
    return tm, const_bytes + tile_bytes(tm)


def prepare_kernel_params(params, *, compute_dtype=jnp.bfloat16):
    """One-time layout/dtype prep (hoisted so the per-call path never re-casts
    or re-pads the full embedding tables)."""
    token_table = params["token_table"]            # (V, E) f32
    genre_table = params["genre_table"]            # (NG, E) f32
    V, E = token_table.shape
    NG = genre_table.shape[0]
    VP = _round_up(max(V, 8), 128)
    NGP = _round_up(max(NG, 1), 128)
    tok_tab = jnp.zeros((VP, E), compute_dtype).at[:V].set(
        token_table.astype(compute_dtype))
    gtab = jnp.zeros((NGP, E), compute_dtype).at[:NG].set(
        genre_table.astype(compute_dtype))
    return {
        "vocab_size": V, "embed_size": E, "num_genres": NG,
        "token_table": tok_tab,                                   # (VP, E) bf16
        "genre_table": gtab,                                      # (NGP, E) bf16
        "token_to_genres": params["token_to_genres"].astype(jnp.int32),
        "genre_aggregation": params["genre_aggregation"].astype(jnp.float32),
        "fusion_w_t": params["fusion_w"].T.astype(compute_dtype),  # (2E, E)
        "fusion_b": params["fusion_b"].reshape(1, E).astype(jnp.float32),
        "ln_gamma": params["ln_gamma"].reshape(1, E).astype(jnp.float32),
        "ln_beta": params["ln_beta"].reshape(1, E).astype(jnp.float32),
    }


def bert_embedding_forward(sequence, kparams, *, tm=2048,
                           out_dtype=jnp.bfloat16):
    """sequence: (B, L) int32 token ids.  Returns (B, L, E) in out_dtype."""
    V = kparams["vocab_size"]
    E = kparams["embed_size"]
    NG = kparams["num_genres"]
    tok_tab = kparams["token_table"]              # (VP, E) bf16
    gtab = kparams["genre_table"]                 # (NGP, E) bf16
    VP, NGP = tok_tab.shape[0], gtab.shape[0]
    t2g = kparams["token_to_genres"]              # (V, G) int32
    G = t2g.shape[1]
    B, L = sequence.shape
    N = B * L

    # In-kernel one-hot token gather only while the table + per-tile one-hot
    # selector stay small; otherwise gather via XLA from the bf16 table.
    gather_in_kernel = (VP <= 2048) and (VP * E * 2 <= 2 * 1024 * 1024)

    out_itemsize = jnp.dtype(out_dtype).itemsize
    tm, vmem_est = _choose_tm(N, E, G, VP, NGP, out_itemsize,
                              gather_in_kernel, tm)
    n_pad = _round_up(N, tm)

    # ---- glue: clamps + tiny id gathers (plain JAX) ----
    # NOTE: OOB-id clamping mirrors the reference module's torch.clamp.
    seq = jnp.clip(sequence, 0, V - 1).reshape(N).astype(jnp.int32)
    gids = jnp.clip(t2g[seq], 0, NG - 1).astype(jnp.int32)       # (N, G)
    ids = jnp.concatenate([seq[:, None], gids], axis=1)          # (N, 1+G)
    if n_pad != N:
        ids = jnp.pad(ids, ((0, n_pad - N), (0, 0)))

    if gather_in_kernel:
        feat = tok_tab
        feat_spec = pl.BlockSpec((VP, E), lambda i: (0, 0))
    else:
        feat = tok_tab[seq]                                      # (N, E) bf16
        if n_pad != N:
            feat = jnp.pad(feat, ((0, n_pad - N), (0, 0)))
        feat_spec = pl.BlockSpec((tm, E), lambda i: (i, 0))

    agg_w = jax.nn.softmax(kparams["genre_aggregation"]).astype(jnp.float32)

    w_t = kparams["fusion_w_t"]
    b = kparams["fusion_b"]
    gamma = kparams["ln_gamma"]
    beta = kparams["ln_beta"]

    grid = (n_pad // tm,)
    flops_per_row = 2 * E * (2 * E + NGP) + (2 * E * VP if gather_in_kernel else 0)
    cost = pl.CostEstimate(
        flops=n_pad * flops_per_row,
        transcendentals=n_pad,
        bytes_accessed=(n_pad * (1 + G) * 4                    # id stream
                        + n_pad * E * out_itemsize             # output stream
                        + (0 if gather_in_kernel else n_pad * E * 2)
                        + VP * E * 2 + NGP * E * 2             # tables
                        + 2 * E * E * 2 + 3 * E * 4 + G * 4))

    vmem_limit = int(min(32 * 1024 * 1024,
                         max(16 * 1024 * 1024, vmem_est + 8 * 1024 * 1024)))

    kernel = functools.partial(fused_embedding_kernel,
                               gather_in_kernel=gather_in_kernel)
    out = pl.pallas_call(
        kernel,
        out_shape=jax.ShapeDtypeStruct((n_pad, E), out_dtype),
        grid=grid,
        in_specs=[
            pl.BlockSpec(memory_space=pltpu.MemorySpace.SMEM),  # agg weights
            pl.BlockSpec((tm, 1 + G), lambda i: (i, 0)),        # id stream
            feat_spec,                                          # table / tok tile
            pl.BlockSpec((NGP, E), lambda i: (0, 0)),           # genre table
            pl.BlockSpec((2 * E, E), lambda i: (0, 0)),         # fusion W^T
            pl.BlockSpec((1, E), lambda i: (0, 0)),             # bias
            pl.BlockSpec((1, E), lambda i: (0, 0)),             # ln gamma
            pl.BlockSpec((1, E), lambda i: (0, 0)),             # ln beta
        ],
        out_specs=pl.BlockSpec((tm, E), lambda i: (i, 0)),
        compiler_params=pltpu.CompilerParams(
            dimension_semantics=("parallel",),
            vmem_limit_bytes=vmem_limit),
        cost_estimate=cost,
    )(agg_w, ids, feat, gtab, w_t, b, gamma, beta)

    return out[:N].reshape(B, L, E)


def make_params(key, *, vocab_size, embed_size, num_genres, max_genres):
    """Deterministic synthetic parameters mirroring the module's __init__."""
    ks = jax.random.split(key, 6)
    token_table = 0.02 * jax.random.normal(ks[0], (vocab_size, embed_size),
                                           jnp.float32)
    token_table = token_table.at[0].set(0.0)                 # padding_idx=0
    genre_table = 0.02 * jax.random.normal(ks[1], (num_genres, embed_size),
                                           jnp.float32)
    genre_table = genre_table.at[0].set(0.0)                 # padding_idx=0

    # Synthetic token -> genre-ids mapping (stands in for the dataset pickle).
    token_to_genres = jax.random.randint(ks[2], (vocab_size, max_genres),
                                         0, num_genres, jnp.int32)
    token_to_genres = token_to_genres.at[0].set(0)           # padding token

    fusion_w = 0.02 * jax.random.normal(ks[3], (embed_size, 2 * embed_size),
                                        jnp.float32)          # torch (out, in)
    fusion_b = 0.02 * jax.random.normal(ks[4], (embed_size,), jnp.float32)

    return {
        "token_table": token_table,
        "genre_table": genre_table,
        "token_to_genres": token_to_genres,
        "genre_aggregation": jnp.ones((max_genres,), jnp.float32) / max_genres,
        "fusion_w": fusion_w,
        "fusion_b": fusion_b,
        "ln_gamma": jnp.ones((embed_size,), jnp.float32),
        "ln_beta": jnp.zeros((embed_size,), jnp.float32),
    }


def _reference(sequence, params, compute_dtype=jnp.bfloat16):
    """Pure-JAX reference with matching precision (bf16 tables, f32 accum)."""
    token_table = params["token_table"]
    genre_table = params["genre_table"]
    V, E = token_table.shape
    NG = genre_table.shape[0]

    seq = jnp.clip(sequence, 0, V - 1)
    tok = token_table.astype(compute_dtype)[seq]                 # (B,L,E) bf16
    gids = jnp.clip(params["token_to_genres"][seq], 0, NG - 1)
    gemb = genre_table.astype(compute_dtype)[gids].astype(jnp.float32)
    w = jax.nn.softmax(params["genre_aggregation"])
    agg = jnp.einsum("bsgd,g->bsd", gemb, w)                     # (B,L,E) f32

    W_t = params["fusion_w"].T.astype(compute_dtype)             # (2E, E)
    cat = jnp.concatenate([tok.astype(jnp.float32), agg],
                          axis=-1).astype(compute_dtype)
    h = jnp.dot(cat, W_t,
                preferred_element_type=jnp.float32) + params["fusion_b"]
    mean = h.mean(-1, keepdims=True)
    var = ((h - mean) ** 2).mean(-1, keepdims=True)
    hn = (h - mean) / jnp.sqrt(var + LN_EPS)
    hn = hn * params["ln_gamma"] + params["ln_beta"]
    return jnp.maximum(hn, 0.0)


if __name__ == "__main__":
    B, L = 2, 8
    VOCAB, EMBED = 64, 128        # E=128 keeps stores lane-dense
    NUM_GENRES, MAX_GENRES = 12, 5

    key = jax.random.PRNGKey(0)
    k_seq, k_par = jax.random.split(key)
    params = make_params(k_par, vocab_size=VOCAB, embed_size=EMBED,
                         num_genres=NUM_GENRES, max_genres=MAX_GENRES)
    kparams = prepare_kernel_params(params)
    sequence = jax.random.randint(k_seq, (B, L), 0, VOCAB, jnp.int32)

    fwd = jax.jit(functools.partial(bert_embedding_forward, kparams=kparams))
    out = jax.block_until_ready(fwd(sequence))

    ref = _reference(sequence, params)
    assert out.shape == (B, L, EMBED)
    assert jnp.allclose(out.astype(jnp.float32), ref, atol=3e-2, rtol=3e-2), \
        "mismatch vs reference"

    print("KERNEL_OK")
</pallas_src>

<mosaic_0001>
module attributes {stable_mosaic.version = 11 : i64} {
  func.func @fused_embedding_kernel(%arg0: i32, %arg1: memref<5xf32, #tpu.memory_space<smem>>, %arg2: memref<8x6xi32, #tpu.memory_space<vmem>>, %arg3: memref<128x128xbf16, #tpu.memory_space<vmem>>, %arg4: memref<128x128xbf16, #tpu.memory_space<vmem>>, %arg5: memref<256x128xbf16, #tpu.memory_space<vmem>>, %arg6: memref<1x128xf32, #tpu.memory_space<vmem>>, %arg7: memref<1x128xf32, #tpu.memory_space<vmem>>, %arg8: memref<1x128xf32, #tpu.memory_space<vmem>>, %arg9: memref<8x128xbf16, #tpu.memory_space<vmem>>) attributes {dimension_semantics = [#tpu.dimension_semantics<parallel>], iteration_bounds = array<i64: 2>, scalar_prefetch = 0 : i64, scratch_operands = 0 : i64, tpu.core_type = #tpu.core_type<tc>, window_params = [{transform_indices = @transform_0, window_bounds = array<i64: 5>}, {transform_indices = @transform_1, window_bounds = array<i64: 8, 6>}, {pipeline_mode = #tpu.pipeline_mode<synchronous>, transform_indices = @transform_2, window_bounds = array<i64: 128, 128>}, {pipeline_mode = #tpu.pipeline_mode<synchronous>, transform_indices = @transform_3, window_bounds = array<i64: 128, 128>}, {pipeline_mode = #tpu.pipeline_mode<synchronous>, transform_indices = @transform_4, window_bounds = array<i64: 256, 128>}, {pipeline_mode = #tpu.pipeline_mode<synchronous>, transform_indices = @transform_5, window_bounds = array<i64: 1, 128>}, {pipeline_mode = #tpu.pipeline_mode<synchronous>, transform_indices = @transform_6, window_bounds = array<i64: 1, 128>}, {pipeline_mode = #tpu.pipeline_mode<synchronous>, transform_indices = @transform_7, window_bounds = array<i64: 1, 128>}, {transform_indices = @transform_8, window_bounds = array<i64: 8, 128>}]} {
    %c0 = arith.constant 0 : index
    %c0_0 = arith.constant 0 : index
    %0 = vector.load %arg2[%c0, %c0_0] : memref<8x6xi32, #tpu.memory_space<vmem>>, vector<8x6xi32>
    %1 = tpu.iota {dimensions = array<i32: 1>} : vector<8x128xi32>
    %2 = vector.extract_strided_slice %0 {offsets = [0, 0], sizes = [8, 1], strides = [1, 1]} : vector<8x6xi32> to vector<8x1xi32>
    %3 = vector.broadcast %2 : vector<8x1xi32> to vector<8x128xi32>
    %4 = arith.cmpi eq, %1, %3 : vector<8x128xi32>
    %5 = arith.extui %4 : vector<8x128xi1> to vector<8x128xi32>
    %6 = arith.sitofp %5 : vector<8x128xi32> to vector<8x128xf32>
    %7 = arith.truncf %6 : vector<8x128xf32> to vector<8x128xbf16>
    %c0_1 = arith.constant 0 : index
    %c0_2 = arith.constant 0 : index
    %8 = vector.load %arg3[%c0_1, %c0_2] : memref<128x128xbf16, #tpu.memory_space<vmem>>, vector<128x128xbf16>
    %cst = arith.constant dense<0.000000e+00> : vector<8x128xf32>
    %9 = tpu.matmul %7, %8, %cst {dimension_numbers = #tpu.dot_dimension_numbers<[1], [0], [0], [1], [0, 0, 1, 1], [], []>} : vector<8x128xbf16>, vector<128x128xbf16>, vector<8x128xf32> -> vector<8x128xf32>
    %10 = arith.truncf %9 : vector<8x128xf32> to vector<8x128xbf16>
    %11 = tpu.iota {dimensions = array<i32: 1>} : vector<8x128xi32>
    %cst_3 = arith.constant 0.000000e+00 : f32
    %12 = vector.broadcast %cst_3 : f32 to vector<8x128xf32>
    %13 = vector.extract_strided_slice %0 {offsets = [0, 1], sizes = [8, 1], strides = [1, 1]} : vector<8x6xi32> to vector<8x1xi32>
    %14 = vector.broadcast %13 : vector<8x1xi32> to vector<8x128xi32>
    %15 = arith.cmpi eq, %11, %14 : vector<8x128xi32>
    %c0_4 = arith.constant 0 : index
    %16 = memref.load %arg1[%c0_4] : memref<5xf32, #tpu.memory_space<smem>>
    %cst_5 = arith.constant 0.000000e+00 : f32
    %17 = vector.broadcast %16 : f32 to vector<8x128xf32>
    %18 = vector.broadcast %cst_5 : f32 to vector<8x128xf32>
    %19 = arith.select %15, %17, %18 : vector<8x128xi1>, vector<8x128xf32>
    %20 = arith.addf %12, %19 : vector<8x128xf32>
    %21 = vector.extract_strided_slice %0 {offsets = [0, 2], sizes = [8, 1], strides = [1, 1]} : vector<8x6xi32> to vector<8x1xi32>
    %22 = vector.broadcast %21 : vector<8x1xi32> to vector<8x128xi32>
    %23 = arith.cmpi eq, %11, %22 : vector<8x128xi32>
    %c1 = arith.constant 1 : index
    %24 = memref.load %arg1[%c1] : memref<5xf32, #tpu.memory_space<smem>>
    %cst_6 = arith.constant 0.000000e+00 : f32
    %25 = vector.broadcast %24 : f32 to vector<8x128xf32>
    %26 = vector.broadcast %cst_6 : f32 to vector<8x128xf32>
    %27 = arith.select %23, %25, %26 : vector<8x128xi1>, vector<8x128xf32>
    %28 = arith.addf %20, %27 : vector<8x128xf32>
    %29 = vector.extract_strided_slice %0 {offsets = [0, 3], sizes = [8, 1], strides = [1, 1]} : vector<8x6xi32> to vector<8x1xi32>
    %30 = vector.broadcast %29 : vector<8x1xi32> to vector<8x128xi32>
    %31 = arith.cmpi eq, %11, %30 : vector<8x128xi32>
    %c2 = arith.constant 2 : index
    %32 = memref.load %arg1[%c2] : memref<5xf32, #tpu.memory_space<smem>>
    %cst_7 = arith.constant 0.000000e+00 : f32
    %33 = vector.broadcast %32 : f32 to vector<8x128xf32>
    %34 = vector.broadcast %cst_7 : f32 to vector<8x128xf32>
    %35 = arith.select %31, %33, %34 : vector<8x128xi1>, vector<8x128xf32>
    %36 = arith.addf %28, %35 : vector<8x128xf32>
    %37 = vector.extract_strided_slice %0 {offsets = [0, 4], sizes = [8, 1], strides = [1, 1]} : vector<8x6xi32> to vector<8x1xi32>
    %38 = vector.broadcast %37 : vector<8x1xi32> to vector<8x128xi32>
    %39 = arith.cmpi eq, %11, %38 : vector<8x128xi32>
    %c3 = arith.constant 3 : index
    %40 = memref.load %arg1[%c3] : memref<5xf32, #tpu.memory_space<smem>>
    %cst_8 = arith.constant 0.000000e+00 : f32
    %41 = vector.broadcast %40 : f32 to vector<8x128xf32>
    %42 = vector.broadcast %cst_8 : f32 to vector<8x128xf32>
    %43 = arith.select %39, %41, %42 : vector<8x128xi1>, vector<8x128xf32>
    %44 = arith.addf %36, %43 : vector<8x128xf32>
    %45 = vector.extract_strided_slice %0 {offsets = [0, 5], sizes = [8, 1], strides = [1, 1]} : vector<8x6xi32> to vector<8x1xi32>
    %46 = vector.broadcast %45 : vector<8x1xi32> to vector<8x128xi32>
    %47 = arith.cmpi eq, %11, %46 : vector<8x128xi32>
    %c4 = arith.constant 4 : index
    %48 = memref.load %arg1[%c4] : memref<5xf32, #tpu.memory_space<smem>>
    %cst_9 = arith.constant 0.000000e+00 : f32
    %49 = vector.broadcast %48 : f32 to vector<8x128xf32>
    %50 = vector.broadcast %cst_9 : f32 to vector<8x128xf32>
    %51 = arith.select %47, %49, %50 : vector<8x128xi1>, vector<8x128xf32>
    %52 = arith.addf %44, %51 : vector<8x128xf32>
    %53 = arith.truncf %52 : vector<8x128xf32> to vector<8x128xbf16>
    %c0_10 = arith.constant 0 : index
    %c0_11 = arith.constant 0 : index
    %54 = vector.load %arg4[%c0_10, %c0_11] : memref<128x128xbf16, #tpu.memory_space<vmem>>, vector<128x128xbf16>
    %cst_12 = arith.constant dense<0.000000e+00> : vector<8x128xf32>
    %55 = tpu.matmul %53, %54, %cst_12 {dimension_numbers = #tpu.dot_dimension_numbers<[1], [0], [0], [1], [0, 0, 1, 1], [], []>} : vector<8x128xbf16>, vector<128x128xbf16>, vector<8x128xf32> -> vector<8x128xf32>
    %56 = arith.truncf %55 : vector<8x128xf32> to vector<8x128xbf16>
    %57 = tpu.concatenate %10, %56 in 1 : vector<8x128xbf16>, vector<8x128xbf16> -> vector<8x256xbf16>
    %c0_13 = arith.constant 0 : index
    %c0_14 = arith.constant 0 : index
    %58 = vector.load %arg5[%c0_13, %c0_14] : memref<256x128xbf16, #tpu.memory_space<vmem>>, vector<256x128xbf16>
    %cst_15 = arith.constant dense<0.000000e+00> : vector<8x128xf32>
    %59 = tpu.matmul %57, %58, %cst_15 {dimension_numbers = #tpu.dot_dimension_numbers<[1], [0], [0], [1], [0, 0, 1, 1], [], []>} : vector<8x256xbf16>, vector<256x128xbf16>, vector<8x128xf32> -> vector<8x128xf32>
    %c0_16 = arith.constant 0 : index
    %c0_17 = arith.constant 0 : index
    %60 = vector.load %arg6[%c0_16, %c0_17] : memref<1x128xf32, #tpu.memory_space<vmem>>, vector<1x128xf32>
    %61 = vector.broadcast %60 : vector<1x128xf32> to vector<8x128xf32>
    %62 = arith.addf %59, %61 : vector<8x128xf32>
    %cst_18 = arith.constant dense<0.000000e+00> : vector<8xf32>
    %63 = vector.multi_reduction <add>, %62, %cst_18 [1] : vector<8x128xf32> to vector<8xf32>
    %64 = vector.shape_cast %63 : vector<8xf32> to vector<8x1xf32>
    %cst_19 = arith.constant 1.280000e+02 : f32
    %65 = vector.broadcast %cst_19 : f32 to vector<8x1xf32>
    %66 = arith.divf %64, %65 : vector<8x1xf32>
    %67 = vector.broadcast %66 : vector<8x1xf32> to vector<8x128xf32>
    %68 = arith.subf %62, %67 : vector<8x128xf32>
    %69 = arith.mulf %68, %68 : vector<8x128xf32>
    %cst_20 = arith.constant dense<0.000000e+00> : vector<8xf32>
    %70 = vector.multi_reduction <add>, %69, %cst_20 [1] : vector<8x128xf32> to vector<8xf32>
    %71 = vector.shape_cast %70 : vector<8xf32> to vector<8x1xf32>
    %cst_21 = arith.constant 1.280000e+02 : f32
    %72 = vector.broadcast %cst_21 : f32 to vector<8x1xf32>
    %73 = arith.divf %71, %72 : vector<8x1xf32>
    %74 = vector.broadcast %66 : vector<8x1xf32> to vector<8x128xf32>
    %75 = arith.subf %62, %74 : vector<8x128xf32>
    %cst_22 = arith.constant 9.99999974E-6 : f32
    %76 = vector.broadcast %cst_22 : f32 to vector<8x1xf32>
    %77 = arith.addf %73, %76 : vector<8x1xf32>
    %78 = math.rsqrt %77 : vector<8x1xf32>
    %79 = vector.broadcast %78 : vector<8x1xf32> to vector<8x128xf32>
    %80 = arith.mulf %75, %79 : vector<8x128xf32>
    %c0_23 = arith.constant 0 : index
    %c0_24 = arith.constant 0 : index
    %81 = vector.load %arg7[%c0_23, %c0_24] : memref<1x128xf32, #tpu.memory_space<vmem>>, vector<1x128xf32>
    %82 = vector.broadcast %81 : vector<1x128xf32> to vector<8x128xf32>
    %83 = arith.mulf %80, %82 : vector<8x128xf32>
    %c0_25 = arith.constant 0 : index
    %c0_26 = arith.constant 0 : index
    %84 = vector.load %arg8[%c0_25, %c0_26] : memref<1x128xf32, #tpu.memory_space<vmem>>, vector<1x128xf32>
    %85 = vector.broadcast %84 : vector<1x128xf32> to vector<8x128xf32>
    %86 = arith.addf %83, %85 : vector<8x128xf32>
    %cst_27 = arith.constant 0.000000e+00 : f32
    %87 = vector.broadcast %cst_27 : f32 to vector<8x128xf32>
    %88 = arith.maximumf %86, %87 : vector<8x128xf32>
    %89 = arith.truncf %88 : vector<8x128xf32> to vector<8x128xbf16>
    %c0_28 = arith.constant 0 : index
    %c0_29 = arith.constant 0 : index
    %90 = vector.load %arg9[%c0_28, %c0_29] : memref<8x128xbf16, #tpu.memory_space<vmem>>, vector<8x128xbf16>
    tpu.vector_store %arg9[%c0_28, %c0_29], %89 {strides = array<i32>} : memref<8x128xbf16, #tpu.memory_space<vmem>>, vector<8x128xbf16>,
    return
  }
  func.func @transform_0(%arg0: i32) -> i32 {
    %c0_i32 = arith.constant 0 : i32
    %c0_i32_0 = arith.constant 0 : i32
    return %c0_i32 : i32
  }
  func.func @transform_1(%arg0: i32) -> (i32, i32) {
    %c0_i32 = arith.constant 0 : i32
    %c0_i32_0 = arith.constant 0 : i32
    return %arg0, %c0_i32 : i32, i32
  }
  func.func @transform_2(%arg0: i32) -> (i32, i32) {
    %c0_i32 = arith.constant 0 : i32
    %c0_i32_0 = arith.constant 0 : i32
    %c0_i32_1 = arith.constant 0 : i32
    return %c0_i32, %c0_i32_0 : i32, i32
  }
  func.func @transform_3(%arg0: i32) -> (i32, i32) {
    %c0_i32 = arith.constant 0 : i32
    %c0_i32_0 = arith.constant 0 : i32
    %c0_i32_1 = arith.constant 0 : i32
    return %c0_i32, %c0_i32_0 : i32, i32
  }
  func.func @transform_4(%arg0: i32) -> (i32, i32) {
    %c0_i32 = arith.constant 0 : i32
    %c0_i32_0 = arith.constant 0 : i32
    %c0_i32_1 = arith.constant 0 : i32
    return %c0_i32, %c0_i32_0 : i32, i32
  }
  func.func @transform_5(%arg0: i32) -> (i32, i32) {
    %c0_i32 = arith.constant 0 : i32
    %c0_i32_0 = arith.constant 0 : i32
    %c0_i32_1 = arith.constant 0 : i32
    return %c0_i32, %c0_i32_0 : i32, i32
  }
  func.func @transform_6(%arg0: i32) -> (i32, i32) {
    %c0_i32 = arith.constant 0 : i32
    %c0_i32_0 = arith.constant 0 : i32
    %c0_i32_1 = arith.constant 0 : i32
    return %c0_i32, %c0_i32_0 : i32, i32
  }
  func.func @transform_7(%arg0: i32) -> (i32, i32) {
    %c0_i32 = arith.constant 0 : i32
    %c0_i32_0 = arith.constant 0 : i32
    %c0_i32_1 = arith.constant 0 : i32
    return %c0_i32, %c0_i32_0 : i32, i32
  }
  func.func @transform_8(%arg0: i32) -> (i32, i32) {
    %c0_i32 = arith.constant 0 : i32
    %c0_i32_0 = arith.constant 0 : i32
    return %arg0, %c0_i32 : i32, i32
  }
}

</mosaic_0001>

<llo_original>
// kernel: bert_embedding_forward.1
$region0: #{bert_embedding_forward.1}
  #allocation0 [shape = 'u32[]', space=smem, size = 0x4, offset = 0x4, fixed_abs, tag = 'smem constant byte address 0x4 - core index']
  #allocation1 [shape = 'u32[144,128]{1,0:T(1,128)}', space=vmem, size = 0x12000, scoped, tag = 'internal scratch']
  %s0 = inlined_call_operand.vmem [shape: f32[5], index: 0, kind: input, shape index: {}]
  %s1 = inlined_call_operand.vmem [shape: s32[16,6], index: 1, kind: input, shape index: {}]
  %s2 = inlined_call_operand.vmem [shape: bf16[128,128], index: 2, kind: input, shape index: {}]
  %s3 = inlined_call_operand.vmem [shape: bf16[128,128], index: 3, kind: input, shape index: {}]
  %s4 = inlined_call_operand.vmem [shape: bf16[256,128], index: 4, kind: input, shape index: {}]
  %s5 = inlined_call_operand.vmem [shape: f32[1,128], index: 5, kind: input, shape index: {}]
  %s6 = inlined_call_operand.vmem [shape: f32[1,128], index: 6, kind: input, shape index: {}]
  %s7 = inlined_call_operand.vmem [shape: f32[1,128], index: 7, kind: input, shape index: {}]
  %s8 = inlined_call_operand.hbm [shape: bf16[16,128], index: 8, kind: output, shape index: {}]
  %s9 = sld [smem:[#allocation0]]
  $region69: #{bert_embedding_forward.1} parent=0
    _
  %s11 = ssub.s32 1, %s9
  %s12 = scalar_select 0, %s11, %s9
  $region1: #{bert_embedding_forward.1} parent=0
    #allocation2 [shape = 'u8[512]{0}', space=smem, size = 0x200, scoped, tag = 'input window, operand 0, single buffered']
    #allocation3 [shape = 's32[2]{0}', space=sflag, size = 0x8, scoped, tag = 'scoped memory for bert_embedding_forward.1']
    #allocation4 [shape = 's32[2]{0}', space=sflag, size = 0x8, scoped, tag = 'scoped memory for bert_embedding_forward.1']
    #allocation5 [shape = 'u8[4096]{0}', space=vmem, size = 0x1000, scoped, tag = 'output window, operand 0']
    %13 = vsyncpa [#allocation4], 0
    %14 = vsyncpa [#allocation3], 0
    %s15 = scalar_lea.sflag [#allocation3], 1
    %16 = vsyncpa %s15, 0
    loop: start=0, step=1, limit=4
    $region2: #{bert_embedding_forward.1} parent=1 // loop_pre_header
      _
    $region3: #{bert_embedding_forward.1} parent=1 // loop_header
      %s18 = sphi 0, %s22
      %p19 = scmp.ge.s32.totalorder %s18, 4
      %s26 = sphi 0, %s26
      %s28 = sphi 0, %s26
      %s29 = sphi 0, %s28
      %s43 = sphi 0, %s29
      %s49 = sphi 0, %s51
      %s52 = sphi 0, %s49
      %s53 = sphi 0, %s52
      %s69 = sphi 0, %s53
      %s73 = sphi 0, %s73
      %s75 = sphi 0, %s73
      %s76 = sphi 0, %s75
      %s90 = sphi 0, %s76
      %s94 = sphi 0, %s94
      %s96 = sphi 0, %s94
      %s97 = sphi 0, %s96
      %s111 = sphi 0, %s97
      %s115 = sphi 0, %s115
      %s117 = sphi 0, %s115
      %s118 = sphi 0, %s117
      %s132 = sphi 0, %s118
      %s136 = sphi 0, %s136
      %s138 = sphi 0, %s136
      %s139 = sphi 0, %s138
      %s153 = sphi 0, %s139
      %s157 = sphi 0, %s157
      %s159 = sphi 0, %s157
      %s160 = sphi 0, %s159
      %s174 = sphi 0, %s160
      %s178 = sphi 0, %s178
      %s180 = sphi 0, %s178
      %s181 = sphi 0, %s180
      %s195 = sphi 0, %s181
      %s201 = sphi 0, %s203
      %s204 = sphi 0, %s201
      %s205 = sphi 0, %s204
      %s221 = sphi 0, %s205
    $region4: #{bert_embedding_forward.1} parent=1 // loop_header_branch
      %21 = sbr.rel (%p19) target = $region8
    $region5: #{bert_embedding_forward.1} parent=1 // loop_body
      %s23 = ssub.s32 %s18, 1
      %s24 = ssub.s32 %s18, 2
      %s25 = sadd.s32 %s18, 1
      %s27 = sadd.s32 %s26, 1
      %p30 = scmp.eq.s32.totalorder %s18, 1
      %p31 = scmp.ne.s32.totalorder %s26, %s28
      %p32 = scmp.eq.s32.totalorder %s18, 0
      %p33 = por %p31, %p32
      %p34 = scmp.ne.s32.totalorder %s26, %s28
      %p35 = scmp.eq.s32.totalorder %s23, 1
      %p36 = por %p34, %p35
      %p37 = scmp.ne.s32.totalorder %s28, %s29
      %p38 = scmp.eq.s32.totalorder %s23, 0
      %p39 = por %p37, %p38
      %p40 = scmp.ne.s32.totalorder %s28, %s29
      %p41 = scmp.eq.s32.totalorder %s24, 1
      %p42 = por %p40, %p41
      %p44 = scmp.ne.s32.totalorder %s29, %s43
      %p45 = scmp.eq.s32.totalorder %s24, 0
      %p46 = por %p44, %p45
      %s47 = ssub.s32 %s18, %s25
      %p48 = scmp.eq.s32.totalorder %s47, 0
      %s50 = sadd.s32 %s49, 1
      %s51 = scalar_select %p48, %s49, %s50
      %p54 = pneg %p48
      %p55 = scmp.eq.s32.totalorder %s18, 1
      %p56 = por %p54, %p55
      %p57 = scmp.ne.s32.totalorder %s49, %s52
      %p58 = scmp.eq.s32.totalorder %s18, 0
      %p59 = por %p57, %p58
      %p60 = scmp.ne.s32.totalorder %s49, %s52
      %p61 = scmp.eq.s32.totalorder %s23, 1
      %p62 = por %p60, %p61
      %p63 = scmp.ne.s32.totalorder %s52, %s53
      %p64 = scmp.eq.s32.totalorder %s23, 0
      %p65 = por %p63, %p64
      %p66 = scmp.ne.s32.totalorder %s52, %s53
      %p67 = scmp.eq.s32.totalorder %s24, 1
      %p68 = por %p66, %p67
      %p70 = scmp.ne.s32.totalorder %s53, %s69
      %p71 = scmp.eq.s32.totalorder %s24, 0
      %p72 = por %p70, %p71
      %s74 = sadd.s32 %s73, 1
      %p77 = scmp.eq.s32.totalorder %s18, 1
      %p78 = scmp.ne.s32.totalorder %s73, %s75
      %p79 = scmp.eq.s32.totalorder %s18, 0
      %p80 = por %p78, %p79
      %p81 = scmp.ne.s32.totalorder %s73, %s75
      %p82 = scmp.eq.s32.totalorder %s23, 1
      %p83 = por %p81, %p82
      %p84 = scmp.ne.s32.totalorder %s75, %s76
      %p85 = scmp.eq.s32.totalorder %s23, 0
      %p86 = por %p84, %p85
      %p87 = scmp.ne.s32.totalorder %s75, %s76
      %p88 = scmp.eq.s32.totalorder %s24, 1
      %p89 = por %p87, %p88
      %p91 = scmp.ne.s32.totalorder %s76, %s90
      %p92 = scmp.eq.s32.totalorder %s24, 0
      %p93 = por %p91, %p92
      %s95 = sadd.s32 %s94, 1
      %p98 = scmp.eq.s32.totalorder %s18, 1
      %p99 = scmp.ne.s32.totalorder %s94, %s96
      %p100 = scmp.eq.s32.totalorder %s18, 0
      %p101 = por %p99, %p100
      %p102 = scmp.ne.s32.totalorder %s94, %s96
      %p103 = scmp.eq.s32.totalorder %s23, 1
      %p104 = por %p102, %p103
      %p105 = scmp.ne.s32.totalorder %s96, %s97
      %p106 = scmp.eq.s32.totalorder %s23, 0
      %p107 = por %p105, %p106
      %p108 = scmp.ne.s32.totalorder %s96, %s97
      %p109 = scmp.eq.s32.totalorder %s24, 1
      %p110 = por %p108, %p109
      %p112 = scmp.ne.s32.totalorder %s97, %s111
      %p113 = scmp.eq.s32.totalorder %s24, 0
      %p114 = por %p112, %p113
      %s116 = sadd.s32 %s115, 1
      %p119 = scmp.eq.s32.totalorder %s18, 1
      %p120 = scmp.ne.s32.totalorder %s115, %s117
      %p121 = scmp.eq.s32.totalorder %s18, 0
      %p122 = por %p120, %p121
      %p123 = scmp.ne.s32.totalorder %s115, %s117
      %p124 = scmp.eq.s32.totalorder %s23, 1
      %p125 = por %p123, %p124
      %p126 = scmp.ne.s32.totalorder %s117, %s118
      %p127 = scmp.eq.s32.totalorder %s23, 0
      %p128 = por %p126, %p127
      %p129 = scmp.ne.s32.totalorder %s117, %s118
      %p130 = scmp.eq.s32.totalorder %s24, 1
      %p131 = por %p129, %p130
      %p133 = scmp.ne.s32.totalorder %s118, %s132
      %p134 = scmp.eq.s32.totalorder %s24, 0
      %p135 = por %p133, %p134
      %s137 = sadd.s32 %s136, 1
      %p140 = scmp.eq.s32.totalorder %s18, 1
      %p141 = scmp.ne.s32.totalorder %s136, %s138
      %p142 = scmp.eq.s32.totalorder %s18, 0
      %p143 = por %p141, %p142
      %p144 = scmp.ne.s32.totalorder %s136, %s138
      %p145 = scmp.eq.s32.totalorder %s23, 1
      %p146 = por %p144, %p145
      %p147 = scmp.ne.s32.totalorder %s138, %s139
      %p148 = scmp.eq.s32.totalorder %s23, 0
      %p149 = por %p147, %p148
      %p150 = scmp.ne.s32.totalorder %s138, %s139
      %p151 = scmp.eq.s32.totalorder %s24, 1
      %p152 = por %p150, %p151
      %p154 = scmp.ne.s32.totalorder %s139, %s153
      %p155 = scmp.eq.s32.totalorder %s24, 0
      %p156 = por %p154, %p155
      %s158 = sadd.s32 %s157, 1
      %p161 = scmp.eq.s32.totalorder %s18, 1
      %p162 = scmp.ne.s32.totalorder %s157, %s159
      %p163 = scmp.eq.s32.totalorder %s18, 0
      %p164 = por %p162, %p163
      %p165 = scmp.ne.s32.totalorder %s157, %s159
      %p166 = scmp.eq.s32.totalorder %s23, 1
      %p167 = por %p165, %p166
      %p168 = scmp.ne.s32.totalorder %s159, %s160
      %p169 = scmp.eq.s32.totalorder %s23, 0
      %p170 = por %p168, %p169
      %p171 = scmp.ne.s32.totalorder %s159, %s160
      %p172 = scmp.eq.s32.totalorder %s24, 1
      %p173 = por %p171, %p172
      %p175 = scmp.ne.s32.totalorder %s160, %s174
      %p176 = scmp.eq.s32.totalorder %s24, 0
      %p177 = por %p175, %p176
      %s179 = sadd.s32 %s178, 1
      %p182 = scmp.eq.s32.totalorder %s18, 1
      %p183 = scmp.ne.s32.totalorder %s178, %s180
      %p184 = scmp.eq.s32.totalorder %s18, 0
      %p185 = por %p183, %p184
      %p186 = scmp.ne.s32.totalorder %s178, %s180
      %p187 = scmp.eq.s32.totalorder %s23, 1
      %p188 = por %p186, %p187
      %p189 = scmp.ne.s32.totalorder %s180, %s181
      %p190 = scmp.eq.s32.totalorder %s23, 0
      %p191 = por %p189, %p190
      %p192 = scmp.ne.s32.totalorder %s180, %s181
      %p193 = scmp.eq.s32.totalorder %s24, 1
      %p194 = por %p192, %p193
      %p196 = scmp.ne.s32.totalorder %s181, %s195
      %p197 = scmp.eq.s32.totalorder %s24, 0
      %p198 = por %p196, %p197
      %s199 = ssub.s32 %s18, %s25
      %p200 = scmp.eq.s32.totalorder %s199, 0
      %s202 = sadd.s32 %s201, 1
      %s203 = scalar_select %p200, %s201, %s202
      %p206 = pneg %p200
      %p207 = scmp.eq.s32.totalorder %s18, 1
      %p208 = por %p206, %p207
      %p209 = scmp.ne.s32.totalorder %s201, %s204
      %p210 = scmp.eq.s32.totalorder %s18, 0
      %p211 = por %p209, %p210
      %p212 = scmp.ne.s32.totalorder %s201, %s204
      %p213 = scmp.eq.s32.totalorder %s23, 1
      %p214 = por %p212, %p213
      %p215 = scmp.ne.s32.totalorder %s204, %s205
      %p216 = scmp.eq.s32.totalorder %s23, 0
      %p217 = por %p215, %p216
      %p218 = scmp.ne.s32.totalorder %s204, %s205
      %p219 = scmp.eq.s32.totalorder %s24, 1
      %p220 = por %p218, %p219
      %p222 = scmp.ne.s32.totalorder %s205, %s221
      %p223 = scmp.eq.s32.totalorder %s24, 0
      %p224 = por %p222, %p223
      %p225 = scmp.le.s32.totalorder 1, %s18
      %p226 = scmp.lt.s32.totalorder %s18, 3
      %p227 = pnand %p225, %p226
      %p228 = pneg %p227
      // Predicated region
      $region9: #{bert_embedding_forward.1} parent=5 // pred_check
        _
      $region10: #{bert_embedding_forward.1} parent=5 // pred_check_branch
        %230 = sbr.rel (%p227) target = $region12
      $region11: #{bert_embedding_forward.1} parent=5 // pred_region
        %s231 = ssub.s32 %s18, 1
        // Predicated region
        $region13: #{bert_embedding_forward.1} parent=11 // pred_check
          %p232 = pneg %p39
        $region14: #{bert_embedding_forward.1} parent=11 // pred_check_branch
          %234 = sbr.rel (%p232) target = $region16
        $region15: #{bert_embedding_forward.1} parent=11 // pred_region
          %s236 = ssub.s32 16, 16
          %237 = vsyncadd [#allocation4], %s236
          %s239 = sshll.u32 %s0, 4
          %s240 = int_to_ptr.vmem [resolvable:$true] %s239
          %242 = dma.vmem_to_smem %s240, 16, [#allocation2], [#allocation4]
        $region16: #{bert_embedding_forward.1} parent=11 // pred_fallthru
          _
        // Predicated region
        $region17: #{bert_embedding_forward.1} parent=11 // pred_check
          %p243 = pneg %p86
        $region18: #{bert_embedding_forward.1} parent=11 // pred_check_branch
          %245 = sbr.rel (%p243) target = $region20
        $region19: #{bert_embedding_forward.1} parent=11 // pred_region
          _
        $region20: #{bert_embedding_forward.1} parent=11 // pred_fallthru
          _
        // Predicated region
        $region21: #{bert_embedding_forward.1} parent=11 // pred_check
          %p246 = pneg %p107
        $region22: #{bert_embedding_forward.1} parent=11 // pred_check_branch
          %248 = sbr.rel (%p246) target = $region24
        $region23: #{bert_embedding_forward.1} parent=11 // pred_region
          _
        $region24: #{bert_embedding_forward.1} parent=11 // pred_fallthru
          _
        // Predicated region
        $region25: #{bert_embedding_forward.1} parent=11 // pred_check
          %p249 = pneg %p128
        $region26: #{bert_embedding_forward.1} parent=11 // pred_check_branch
          %251 = sbr.rel (%p249) target = $region28
        $region27: #{bert_embedding_forward.1} parent=11 // pred_region
          _
        $region28: #{bert_embedding_forward.1} parent=11 // pred_fallthru
          _
        // Predicated region
        $region29: #{bert_embedding_forward.1} parent=11 // pred_check
          %p252 = pneg %p149
        $region30: #{bert_embedding_forward.1} parent=11 // pred_check_branch
          %254 = sbr.rel (%p252) target = $region32
        $region31: #{bert_embedding_forward.1} parent=11 // pred_region
          _
        $region32: #{bert_embedding_forward.1} parent=11 // pred_fallthru
          _
        // Predicated region
        $region33: #{bert_embedding_forward.1} parent=11 // pred_check
          %p255 = pneg %p170
        $region34: #{bert_embedding_forward.1} parent=11 // pred_check_branch
          %257 = sbr.rel (%p255) target = $region36
        $region35: #{bert_embedding_forward.1} parent=11 // pred_region
          _
        $region36: #{bert_embedding_forward.1} parent=11 // pred_fallthru
          _
        // Predicated region
        $region37: #{bert_embedding_forward.1} parent=11 // pred_check
          %p258 = pneg %p191
        $region38: #{bert_embedding_forward.1} parent=11 // pred_check_branch
          %260 = sbr.rel (%p258) target = $region40
        $region39: #{bert_embedding_forward.1} parent=11 // pred_region
          _
        $region40: #{bert_embedding_forward.1} parent=11 // pred_fallthru
          _
      $region12: #{bert_embedding_forward.1} parent=5 // pred_fallthru
        _
      %p261 = scmp.lt.s32.totalorder %s18, 2
      // Predicated region
      $region41: #{bert_embedding_forward.1} parent=5 // pred_check
        %p262 = pneg %p261
      $region42: #{bert_embedding_forward.1} parent=5 // pred_check_branch
        %264 = sbr.rel (%p262) target = $region44
      $region43: #{bert_embedding_forward.1} parent=5 // pred_region
        // Predicated region
        $region45: #{bert_embedding_forward.1} parent=43 // pred_check
          %p265 = pneg %p59
        $region46: #{bert_embedding_forward.1} parent=43 // pred_check_branch
          %267 = sbr.rel (%p265) target = $region48
        $region47: #{bert_embedding_forward.1} parent=43 // pred_region
          %p268 = scmp.lt.s32.totalorder %s18, 1
          %s269 = scalar_select %p268, %s18, 1
          %s270 = smul.addr %s269, 8
          %s271 = scalar_lea.vmem %s1, %s270
        $region48: #{bert_embedding_forward.1} parent=43 // pred_fallthru
          _
      $region44: #{bert_embedding_forward.1} parent=5 // pred_fallthru
        _
      %p272 = scmp.le.s32.totalorder 1, %s18
      %p273 = scmp.lt.s32.totalorder %s18, 3
      %p274 = pnand %p272, %p273
      %p275 = pneg %p274
      // Predicated region
      $region49: #{bert_embedding_forward.1} parent=5 // pred_check
        _
      $region50: #{bert_embedding_forward.1} parent=5 // pred_check_branch
        %277 = sbr.rel (%p274) target = $region52
      $region51: #{bert_embedding_forward.1} parent=5 // pred_region
        %s278 = ssub.s32 %s18, 1
        // Predicated region
        $region53: #{bert_embedding_forward.1} parent=51 // pred_check
          %p279 = pneg %p39
        $region54: #{bert_embedding_forward.1} parent=51 // pred_check_branch
          %281 = sbr.rel (%p279) target = $region56
        $region55: #{bert_embedding_forward.1} parent=51 // pred_region
          %282 = dma.done [#allocation4], 16
        $region56: #{bert_embedding_forward.1} parent=51 // pred_fallthru
          _
        %283 = sfence
        %p284 = pneg %p39
        %p285 = pneg %p36
        %p286 = scmp.lt.s32.totalorder %s23, 1
        %s287 = scalar_select %p286, %s23, 1
        %s288 = smul.addr %s287, 8
        %s289 = scalar_lea.vmem %s1, %s288
        %p290 = pneg %p65
        %p291 = pneg %p62
        %p292 = pneg %p86
        %p293 = pneg %p83
        %p294 = pneg %p107
        %p295 = pneg %p104
        %p296 = pneg %p128
        %p297 = pneg %p125
        %p298 = pneg %p149
        %p299 = pneg %p146
        %p300 = pneg %p170
        %p301 = pneg %p167
        %p302 = pneg %p191
        %p303 = pneg %p188
        %p304 = pneg %p217
        %p305 = pneg %p214
        %s306 = sand.u32 %s204, 1
        %s307 = scalar_lea.sflag [#allocation3], %s306
        %s308 = sand.u32 %s204, 1
        %s309 = smul.addr %s308, 4
        %s310 = scalar_lea.vmem [#allocation5], %s309
        %p311 = scmp.lt.s32.totalorder %s23, 1
        %s312 = scalar_select %p311, %s23, 1
        %s313 = smul.addr %s312, 8
        %s314 = scalar_lea.vmem %s1, %s313
        %v316 = vld [vmem:[%s314] sm:$0xff]
        %v317 = vlaneseq
        %v318 = vand.u32 %v317, 127
        %319 = vset.pattern.permute.xlu0 0
        %320 = vperm.xlu0 %319, %v316
        %v321 = vpop.permute.xlu0 %320
        %vm322 = vcmp.eq.s32.totalorder %v318, %v321
        %v323 = vsel %vm322, 1, 0
        %v324 = vcvt.s32.f32 %v323
        %v325 = vpack.c.bf16 %v324, %v324
        %v326 = vld [vmem:[%s2] sm:$0xf]
        %v327 = vld [vmem:[%s2 + $0x4] sm:$0xf]
        %v328 = vld [vmem:[%s2 + $0x8] sm:$0xf]
        %v329 = vld [vmem:[%s2 + $0xc] sm:$0xf]
        %v330 = vld [vmem:[%s2 + $0x10] sm:$0xf]
        %v331 = vld [vmem:[%s2 + $0x14] sm:$0xf]
        %v332 = vld [vmem:[%s2 + $0x18] sm:$0xf]
        %v333 = vld [vmem:[%s2 + $0x1c] sm:$0xf]
        %v334 = vld [vmem:[%s2 + $0x20] sm:$0xf]
        %v335 = vld [vmem:[%s2 + $0x24] sm:$0xf]
        %v336 = vld [vmem:[%s2 + $0x28] sm:$0xf]
        %v337 = vld [vmem:[%s2 + $0x2c] sm:$0xf]
        %v338 = vld [vmem:[%s2 + $0x30] sm:$0xf]
        %v339 = vld [vmem:[%s2 + $0x34] sm:$0xf]
        %v340 = vld [vmem:[%s2 + $0x38] sm:$0xf]
        %v341 = vld [vmem:[%s2 + $0x3c] sm:$0xf]
        %v358 = vunpack.c.l.b16 %v326
        %v359 = vunpack.c.l.b16 %v327
        %v360 = vunpack.c.l.b16 %v328
        %v361 = vunpack.c.l.b16 %v329
        %v362 = vunpack.c.l.b16 %v330
        %v363 = vunpack.c.l.b16 %v331
        %v364 = vunpack.c.l.b16 %v332
        %v365 = vunpack.c.l.b16 %v333
        %v366 = vunpack.c.l.b16 %v334
        %v367 = vunpack.c.l.b16 %v335
        %v368 = vunpack.c.l.b16 %v336
        %v369 = vunpack.c.l.b16 %v337
        %v370 = vunpack.c.l.b16 %v338
        %v371 = vunpack.c.l.b16 %v339
        %v372 = vunpack.c.l.b16 %v340
        %v373 = vunpack.c.l.b16 %v341
        %v374 = vpack.c.b16 %v359, %v358
        %v375 = vpack.c.b16 %v361, %v360
        %v376 = vpack.c.b16 %v363, %v362
        %v377 = vpack.c.b16 %v365, %v364
        %v378 = vpack.c.b16 %v367, %v366
        %v379 = vpack.c.b16 %v369, %v368
        %v380 = vpack.c.b16 %v371, %v370
        %v381 = vpack.c.b16 %v373, %v372
        %390 = vmatprep.subr.bf16.mxu0 0
        %391 = vmatpush1.bf16.msra.mxu0 %v381
        %392 = vmatprep.subr.bf16.mxu0 0
        %393 = vmatpush1.bf16.msra.mxu0 %v380
        %394 = vmatprep.subr.bf16.mxu0 0
        %395 = vmatpush1.bf16.msra.mxu0 %v379
        %396 = vmatprep.subr.bf16.mxu0 0
        %397 = vmatpush1.bf16.msra.mxu0 %v378
        %398 = vmatprep.subr.bf16.mxu0 0
        %399 = vmatpush1.bf16.msra.mxu0 %v377
        %400 = vmatprep.subr.bf16.mxu0 0
        %401 = vmatpush1.bf16.msra.mxu0 %v376
        %402 = vmatprep.subr.bf16.mxu0 0
        %403 = vmatpush1.bf16.msra.mxu0 %v375
        %404 = vmatprep.subr.bf16.mxu0 0
        %405 = vmatpush1.bf16.msra.mxu0 %v374
        %406 = vmatprep.subr.bf16.mxu0 0
        %407 = vmatpush2.bf16.msra.mxu0 0
        %408 = vmatprep.subr.bf16.mxu0 0
        %409 = vmatpush2.bf16.msra.mxu0 0
        %410 = vmatprep.subr.bf16.mxu0 0
        %411 = vmatpush2.bf16.msra.mxu0 0
        %412 = vmatprep.subr.bf16.mxu0 0
        %413 = vmatpush2.bf16.msra.mxu0 0
        %414 = vmatprep.subr.bf16.mxu0 0
        %415 = vmatpush2.bf16.msra.mxu0 0
        %416 = vmatprep.subr.bf16.mxu0 0
        %417 = vmatpush2.bf16.msra.mxu0 0
        %418 = vmatprep.subr.bf16.mxu0 0
        %419 = vmatpush2.bf16.msra.mxu0 0
        %420 = vmatprep.subr.bf16.mxu0 0
        %421 = vmatpush2.bf16.msra.mxu0 0
        %422 = vmatprep.mubr.bf16.mxu0 0
        %423 = vmatmul.mubr.bf16.gmra.mxu0 %v325
        %v424 = vpop.f32.mrf.mxu0
        %v425 = vadd.f32 0.0, %v424
        %v426 = vpop.f32.mrf.mxu0
        %v427 = vpop.f32.mrf.mxu0
        %v428 = vpop.f32.mrf.mxu0
        %429 = vdwg.mxu0
        %v430 = vpack.c.bf16 %v425, %v425
        %431 = vset.pattern.permute.xlu0 1
        %432 = vperm.xlu0 %431, %v316
        %v433 = vpop.permute.xlu0 %432
        %vm434 = vcmp.eq.s32.totalorder %v318, %v433
        %s435 = sld [smem:[#allocation2]]
        %v436 = vstv %s435
        %v437 = vsel %vm434, %v436, 0.0
        %v438 = vadd.f32 %v437, 0.0
        %439 = vset.pattern.permute.xlu0 2
        %440 = vperm.xlu0 %439, %v316
        %v441 = vpop.permute.xlu0 %440
        %vm442 = vcmp.eq.s32.totalorder %v318, %v441
        %s443 = sld [smem:[#allocation2 + $0x1]]
        %v444 = vstv %s443
        %v445 = vsel %vm442, %v444, 0.0
        %v446 = vadd.f32 %v438, %v445
        %447 = vset.pattern.permute.xlu0 3
        %448 = vperm.xlu0 %447, %v316
        %v449 = vpop.permute.xlu0 %448
        %vm450 = vcmp.eq.s32.totalorder %v318, %v449
        %s451 = sld [smem:[#allocation2 + $0x2]]
        %v452 = vstv %s451
        %v453 = vsel %vm450, %v452, 0.0
        %v454 = vadd.f32 %v446, %v453
        %455 = vset.pattern.permute.xlu0 4
        %456 = vperm.xlu0 %455, %v316
        %v457 = vpop.permute.xlu0 %456
        %vm458 = vcmp.eq.s32.totalorder %v318, %v457
        %s459 = sld [smem:[#allocation2 + $0x3]]
        %v460 = vstv %s459
        %v461 = vsel %vm458, %v460, 0.0
        %v462 = vadd.f32 %v454, %v461
        %463 = vset.pattern.permute.xlu0 5
        %464 = vperm.xlu0 %463, %v316
        %v465 = vpop.permute.xlu0 %464
        %vm466 = vcmp.eq.s32.totalorder %v318, %v465
        %s467 = sld [smem:[#allocation2 + $0x4]]
        %v468 = vstv %s467
        %v469 = vsel %vm466, %v468, 0.0
        %v470 = vadd.f32 %v462, %v469
        %v471 = vpack.c.bf16 %v470, %v470
        %v472 = vld [vmem:[%s3] sm:$0xf]
        %v473 = vld [vmem:[%s3 + $0x4] sm:$0xf]
        %v474 = vld [vmem:[%s3 + $0x8] sm:$0xf]
        %v475 = vld [vmem:[%s3 + $0xc] sm:$0xf]
        %v476 = vld [vmem:[%s3 + $0x10] sm:$0xf]
        %v477 = vld [vmem:[%s3 + $0x14] sm:$0xf]
        %v478 = vld [vmem:[%s3 + $0x18] sm:$0xf]
        %v479 = vld [vmem:[%s3 + $0x1c] sm:$0xf]
        %v480 = vld [vmem:[%s3 + $0x20] sm:$0xf]
        %v481 = vld [vmem:[%s3 + $0x24] sm:$0xf]
        %v482 = vld [vmem:[%s3 + $0x28] sm:$0xf]
        %v483 = vld [vmem:[%s3 + $0x2c] sm:$0xf]
        %v484 = vld [vmem:[%s3 + $0x30] sm:$0xf]
        %v485 = vld [vmem:[%s3 + $0x34] sm:$0xf]
        %v486 = vld [vmem:[%s3 + $0x38] sm:$0xf]
        %v487 = vld [vmem:[%s3 + $0x3c] sm:$0xf]
        %v504 = vunpack.c.l.b16 %v472
        %v505 = vunpack.c.l.b16 %v473
        %v506 = vunpack.c.l.b16 %v474
        %v507 = vunpack.c.l.b16 %v475
        %v508 = vunpack.c.l.b16 %v476
        %v509 = vunpack.c.l.b16 %v477
        %v510 = vunpack.c.l.b16 %v478
        %v511 = vunpack.c.l.b16 %v479
        %v512 = vunpack.c.l.b16 %v480
        %v513 = vunpack.c.l.b16 %v481
        %v514 = vunpack.c.l.b16 %v482
        %v515 = vunpack.c.l.b16 %v483
        %v516 = vunpack.c.l.b16 %v484
        %v517 = vunpack.c.l.b16 %v485
        %v518 = vunpack.c.l.b16 %v486
        %v519 = vunpack.c.l.b16 %v487
        %v520 = vpack.c.b16 %v505, %v504
        %v521 = vpack.c.b16 %v507, %v506
        %v522 = vpack.c.b16 %v509, %v508
        %v523 = vpack.c.b16 %v511, %v510
        %v524 = vpack.c.b16 %v513, %v512
        %v525 = vpack.c.b16 %v515, %v514
        %v526 = vpack.c.b16 %v517, %v516
        %v527 = vpack.c.b16 %v519, %v518
        %536 = vmatprep.subr.bf16.mxu0 0
        %537 = vmatpush1.bf16.msra.mxu0 %v527
        %538 = vmatprep.subr.bf16.mxu0 0
        %539 = vmatpush1.bf16.msra.mxu0 %v526
        %540 = vmatprep.subr.bf16.mxu0 0
        %541 = vmatpush1.bf16.msra.mxu0 %v525
        %542 = vmatprep.subr.bf16.mxu0 0
        %543 = vmatpush1.bf16.msra.mxu0 %v524
        %544 = vmatprep.subr.bf16.mxu0 0
        %545 = vmatpush1.bf16.msra.mxu0 %v523
        %546 = vmatprep.subr.bf16.mxu0 0
        %547 = vmatpush1.bf16.msra.mxu0 %v522
        %548 = vmatprep.subr.bf16.mxu0 0
        %549 = vmatpush1.bf16.msra.mxu0 %v521
        %550 = vmatprep.subr.bf16.mxu0 0
        %551 = vmatpush1.bf16.msra.mxu0 %v520
        %552 = vmatprep.subr.bf16.mxu0 0
        %553 = vmatpush2.bf16.msra.mxu0 0
        %554 = vmatprep.subr.bf16.mxu0 0
        %555 = vmatpush2.bf16.msra.mxu0 0
        %556 = vmatprep.subr.bf16.mxu0 0
        %557 = vmatpush2.bf16.msra.mxu0 0
        %558 = vmatprep.subr.bf16.mxu0 0
        %559 = vmatpush2.bf16.msra.mxu0 0
        %560 = vmatprep.subr.bf16.mxu0 0
        %561 = vmatpush2.bf16.msra.mxu0 0
        %562 = vmatprep.subr.bf16.mxu0 0
        %563 = vmatpush2.bf16.msra.mxu0 0
        %564 = vmatprep.subr.bf16.mxu0 0
        %565 = vmatpush2.bf16.msra.mxu0 0
        %566 = vmatprep.subr.bf16.mxu0 0
        %567 = vmatpush2.bf16.msra.mxu0 0
        %568 = vmatprep.mubr.bf16.mxu0 0
        %569 = vmatmul.mubr.bf16.gmra.mxu0 %v471
        %v570 = vpop.f32.mrf.mxu0
        %v571 = vadd.f32 0.0, %v570
        %v572 = vpop.f32.mrf.mxu0
        %v573 = vpop.f32.mrf.mxu0
        %v574 = vpop.f32.mrf.mxu0
        %575 = vdwg.mxu0
        %v576 = vpack.c.bf16 %v571, %v571
        %v577 = vld [vmem:[%s4] sm:$0xf]
        %v578 = vld [vmem:[%s4 + $0x4] sm:$0xf]
        %v579 = vld [vmem:[%s4 + $0x8] sm:$0xf]
        %v580 = vld [vmem:[%s4 + $0xc] sm:$0xf]
        %v581 = vld [vmem:[%s4 + $0x10] sm:$0xf]
        %v582 = vld [vmem:[%s4 + $0x14] sm:$0xf]
        %v583 = vld [vmem:[%s4 + $0x18] sm:$0xf]
        %v584 = vld [vmem:[%s4 + $0x1c] sm:$0xf]
        %v585 = vld [vmem:[%s4 + $0x20] sm:$0xf]
        %v586 = vld [vmem:[%s4 + $0x24] sm:$0xf]
        %v587 = vld [vmem:[%s4 + $0x28] sm:$0xf]
        %v588 = vld [vmem:[%s4 + $0x2c] sm:$0xf]
        %v589 = vld [vmem:[%s4 + $0x30] sm:$0xf]
        %v590 = vld [vmem:[%s4 + $0x34] sm:$0xf]
        %v591 = vld [vmem:[%s4 + $0x38] sm:$0xf]
        %v592 = vld [vmem:[%s4 + $0x3c] sm:$0xf]
        %v593 = vld [vmem:[%s4 + $0x40] sm:$0xf]
        %v594 = vld [vmem:[%s4 + $0x44] sm:$0xf]
        %v595 = vld [vmem:[%s4 + $0x48] sm:$0xf]
        %v596 = vld [vmem:[%s4 + $0x4c] sm:$0xf]
        %v597 = vld [vmem:[%s4 + $0x50] sm:$0xf]
        %v598 = vld [vmem:[%s4 + $0x54] sm:$0xf]
        %v599 = vld [vmem:[%s4 + $0x58] sm:$0xf]
        %v600 = vld [vmem:[%s4 + $0x5c] sm:$0xf]
        %v601 = vld [vmem:[%s4 + $0x60] sm:$0xf]
        %v602 = vld [vmem:[%s4 + $0x64] sm:$0xf]
        %v603 = vld [vmem:[%s4 + $0x68] sm:$0xf]
        %v604 = vld [vmem:[%s4 + $0x6c] sm:$0xf]
        %v605 = vld [vmem:[%s4 + $0x70] sm:$0xf]
        %v606 = vld [vmem:[%s4 + $0x74] sm:$0xf]
        %v607 = vld [vmem:[%s4 + $0x78] sm:$0xf]
        %v608 = vld [vmem:[%s4 + $0x7c] sm:$0xf]
        %v609 = vld [vmem:[%s5] sm:$0x1]
        %v611 = vlaneseq
        %v612 = vshrl.u32 %v611, 7
        %v613 = vsub.s32 0, %v612
        %v614 = vrot.slane %v609, %v613
        %v648 = vunpack.c.l.b16 %v577
        %v649 = vunpack.c.l.b16 %v578
        %v650 = vunpack.c.l.b16 %v579
        %v651 = vunpack.c.l.b16 %v580
        %v652 = vunpack.c.l.b16 %v581
        %v653 = vunpack.c.l.b16 %v582
        %v654 = vunpack.c.l.b16 %v583
        %v655 = vunpack.c.l.b16 %v584
        %v656 = vunpack.c.l.b16 %v585
        %v657 = vunpack.c.l.b16 %v586
        %v658 = vunpack.c.l.b16 %v587
        %v659 = vunpack.c.l.b16 %v588
        %v660 = vunpack.c.l.b16 %v589
        %v661 = vunpack.c.l.b16 %v590
        %v662 = vunpack.c.l.b16 %v591
        %v663 = vunpack.c.l.b16 %v592
        %v664 = vunpack.c.l.b16 %v593
        %v665 = vunpack.c.l.b16 %v594
        %v666 = vunpack.c.l.b16 %v595
        %v667 = vunpack.c.l.b16 %v596
        %v668 = vunpack.c.l.b16 %v597
        %v669 = vunpack.c.l.b16 %v598
        %v670 = vunpack.c.l.b16 %v599
        %v671 = vunpack.c.l.b16 %v600
        %v672 = vunpack.c.l.b16 %v601
        %v673 = vunpack.c.l.b16 %v602
        %v674 = vunpack.c.l.b16 %v603
        %v675 = vunpack.c.l.b16 %v604
        %v676 = vunpack.c.l.b16 %v605
        %v677 = vunpack.c.l.b16 %v606
        %v678 = vunpack.c.l.b16 %v607
        %v679 = vunpack.c.l.b16 %v608
        %v680 = vpack.c.b16 %v649, %v648
        %v681 = vpack.c.b16 %v651, %v650
        %v682 = vpack.c.b16 %v653, %v652
        %v683 = vpack.c.b16 %v655, %v654
        %v684 = vpack.c.b16 %v657, %v656
        %v685 = vpack.c.b16 %v659, %v658
        %v686 = vpack.c.b16 %v661, %v660
        %v687 = vpack.c.b16 %v663, %v662
        %v688 = vpack.c.b16 %v665, %v664
        %v689 = vpack.c.b16 %v667, %v666
        %v690 = vpack.c.b16 %v669, %v668
        %v691 = vpack.c.b16 %v671, %v670
        %v692 = vpack.c.b16 %v673, %v672
        %v693 = vpack.c.b16 %v675, %v674
        %v694 = vpack.c.b16 %v677, %v676
        %v695 = vpack.c.b16 %v679, %v678
        %712 = vmatprep.subr.bf16.mxu0 0
        %713 = vmatpush1.bf16.msra.mxu0 %v687
        %714 = vmatprep.subr.bf16.mxu0 0
        %715 = vmatpush1.bf16.msra.mxu0 %v686
        %716 = vmatprep.subr.bf16.mxu0 0
        %717 = vmatpush1.bf16.msra.mxu0 %v685
        %718 = vmatprep.subr.bf16.mxu0 0
        %719 = vmatpush1.bf16.msra.mxu0 %v684
        %720 = vmatprep.subr.bf16.mxu0 0
        %721 = vmatpush1.bf16.msra.mxu0 %v683
        %722 = vmatprep.subr.bf16.mxu0 0
        %723 = vmatpush1.bf16.msra.mxu0 %v682
        %724 = vmatprep.subr.bf16.mxu0 0
        %725 = vmatpush1.bf16.msra.mxu0 %v681
        %726 = vmatprep.subr.bf16.mxu0 0
        %727 = vmatpush1.bf16.msra.mxu0 %v680
        %728 = vmatprep.subr.bf16.mxu0 0
        %729 = vmatpush2.bf16.msra.mxu0 %v695
        %730 = vmatprep.subr.bf16.mxu0 0
        %731 = vmatpush2.bf16.msra.mxu0 %v694
        %732 = vmatprep.subr.bf16.mxu0 0
        %733 = vmatpush2.bf16.msra.mxu0 %v693
        %734 = vmatprep.subr.bf16.mxu0 0
        %735 = vmatpush2.bf16.msra.mxu0 %v692
        %736 = vmatprep.subr.bf16.mxu0 0
        %737 = vmatpush2.bf16.msra.mxu0 %v691
        %738 = vmatprep.subr.bf16.mxu0 0
        %739 = vmatpush2.bf16.msra.mxu0 %v690
        %740 = vmatprep.subr.bf16.mxu0 0
        %741 = vmatpush2.bf16.msra.mxu0 %v689
        %742 = vmatprep.subr.bf16.mxu0 0
        %743 = vmatpush2.bf16.msra.mxu0 %v688
        %744 = vmatprep.mubr.bf16.mxu0 %v576
        %745 = vmatmul.mubr.bf16.gmra.mxu0 %v430
        %v746 = vpop.f32.mrf.mxu0
        %v747 = vadd.f32 %v614, %v746
        %v748 = vpop.f32.mrf.mxu0
        %v749 = vpop.f32.mrf.mxu0
        %v750 = vpop.f32.mrf.mxu0
        %751 = vdwg.mxu0
        %752 = vadd.xlane.f32.xlu0 %v747
        %v753 = vpop.xlane.xlu0 %752
        %v754 = vrcp.pop 128.0
        %v755 = vmul.f32 %v753, %v754
        %v756 = vsub.f32 %v747, %v755
        %v757 = vmul.f32 %v756, %v756
        %758 = vadd.xlane.f32.xlu0 %v757
        %v759 = vpop.xlane.xlu0 %758
        %v760 = vmul.f32 %v759, %v754
        %v761 = vadd.f32 %v760, 1e-05
        %v762 = vrsqrt.pop %v761
        %v763 = vmul.f32 %v756, %v762
        %v764 = vld [vmem:[%s6] sm:$0x1]
        %v766 = vlaneseq
        %v767 = vshrl.u32 %v766, 7
        %v768 = vsub.s32 0, %v767
        %v769 = vrot.slane %v764, %v768
        %v771 = vmul.f32 %v763, %v769
        %v772 = vld [vmem:[%s7] sm:$0x1]
        %v774 = vlaneseq
        %v775 = vshrl.u32 %v774, 7
        %v776 = vsub.s32 0, %v775
        %v777 = vrot.slane %v772, %v776
        %v779 = vadd.f32 %v771, %v777
        %v780 = vmax.f32 %v779, 0.0
        %v781 = vpack.c.bf16 %v780, %v780
        %782 = vst [vmem:[%s310] sm:$0xf] %v781
        %s783 = sand.u32 %s204, 1
        %s784 = scalar_lea.sflag [#allocation3], %s783
        %s785 = sand.u32 %s204, 1
        %s786 = smul.addr %s785, 4
        %s787 = scalar_lea.vmem [#allocation5], %s786
        // Predicated region
        $region57: #{bert_embedding_forward.1} parent=51 // pred_check
          %p788 = pneg %p214
        $region58: #{bert_embedding_forward.1} parent=51 // pred_check_branch
          %790 = sbr.rel (%p788) target = $region60
        $region59: #{bert_embedding_forward.1} parent=51 // pred_region
          %s792 = ssub.s32 64, 64
          %793 = vsyncadd %s784, %s792
          %s794 = smul.addr %s23, 64
          %s795 = scalar_lea.hbm %s8, %s794
          %s797 = sshll.u32 %s787, 4
          %s798 = int_to_ptr.vmem [resolvable:$true] %s797
          %800 = dma.vmem_to_hbm [thread:$0]  %s798, 64, %s795, %s784
        $region60: #{bert_embedding_forward.1} parent=51 // pred_fallthru
          _
      $region52: #{bert_embedding_forward.1} parent=5 // pred_fallthru
        _
      %p801 = scmp.le.s32.totalorder 2, %s18
      // Predicated region
      $region61: #{bert_embedding_forward.1} parent=5 // pred_check
        %p802 = pneg %p801
      $region62: #{bert_embedding_forward.1} parent=5 // pred_check_branch
        %804 = sbr.rel (%p802) target = $region64
      $region63: #{bert_embedding_forward.1} parent=5 // pred_region
        %s805 = ssub.s32 %s18, 2
        // Predicated region
        $region65: #{bert_embedding_forward.1} parent=63 // pred_check
          %p806 = pneg %p220
        $region66: #{bert_embedding_forward.1} parent=63 // pred_check_branch
          %808 = sbr.rel (%p806) target = $region68
        $region67: #{bert_embedding_forward.1} parent=63 // pred_region
          %s809 = sand.u32 %s205, 1
          %s810 = scalar_lea.sflag [#allocation3], %s809
          %s811 = sand.u32 %s205, 1
          %s812 = smul.addr %s811, 4
          %s813 = scalar_lea.vmem [#allocation5], %s812
          %814 = dma.done %s810, 64
        $region68: #{bert_embedding_forward.1} parent=63 // pred_fallthru
          _
      $region64: #{bert_embedding_forward.1} parent=5 // pred_fallthru
        _
    $region6: #{bert_embedding_forward.1} parent=1 // loop_footer
      %s22 = sadd.s32 1, %s18
    $region7: #{bert_embedding_forward.1} parent=1 // loop_footer_branch
      %17 = sbr.rel target = $region3
    $region8: #{bert_embedding_forward.1} parent=1 // loop_exit
      _
    %815 = vsyncpa [#allocation3], 1
    %s816 = scalar_lea.sflag [#allocation3], 1
    %817 = vsyncpa %s816, 1
    %818 = vsyncpa [#allocation4], 1
    %s819 = scalar_lea.sflag [#allocation4], 1
    %820 = vsyncpa %s819, 1

</llo_original>
